<compile_context>
chip_gen: v5e
topology: v5e:2x2
jax: 0.10.0
libtpu: 0.0.40
codegen_flags: <defaults>
</compile_context>

<pallas_src>
import functools

import numpy as np
import jax
import jax.numpy as jnp
from jax.experimental import pallas as pl
from jax.experimental.pallas import tpu as pltpu


def _round_up(x, m):
    return ((x + m - 1) // m) * m


def _compute_dtype():
    # bf16 x bf16 -> f32 hits the MXU fast path on TPU, but the XLA:CPU
    # executor (used when the kernel is interpreted on a CPU backend) rejects
    # that dot, so fall back to f32 off-TPU.
    try:
        if jax.devices()[0].platform == "tpu":
            return jnp.bfloat16
    except Exception:
        pass
    return jnp.float32


_COMPUTE_DTYPE = _compute_dtype()


def _vmem_limit_bytes():
    # Generation-dependent: ~96 MiB on v5e/v6e (128 MiB physical VMEM),
    # ~48 MiB on v7x (64 MiB physical per TensorCore). Leave headroom for
    # Mosaic internal scratch and double buffering.
    phys = 128 * 1024 * 1024
    try:
        phys = int(pltpu.get_tpu_info().vmem_capacity_bytes)
    except Exception:
        pass
    return min(int(phys * 3 // 4), 100 * 1024 * 1024)


# ---------------------------------------------------------------------------
# Fused layer kernel:  H = relu(A_hat @ (X @ W) + b)  and partial sum-pool.
# grid = (node row stripes, hidden col tiles, compacted nonzero k-blocks)
# ---------------------------------------------------------------------------
def _gcn_layer_kernel(tbl_ref, cnt_ref, a_ref, x_ref, w_ref, b_ref, p_ref,
                      h_ref, pool_ref, acc_ref):
    i = pl.program_id(0)
    k = pl.program_id(2)
    nk = pl.num_programs(2)

    @pl.when(k == 0)
    def _init():
        acc_ref[...] = jnp.zeros_like(acc_ref)

    # Only the first cnt[i] table slots hold real (nonzero) A_hat blocks; the
    # padded slots repeat a valid block index (harmless redundant DMA) and are
    # skipped on the MXU here.
    @pl.when(k < cnt_ref[i])
    def _accumulate():
        # In-kernel X @ W for this k-stripe (W is resident in VMEM), then
        # accumulate the aggregation matmul in f32.
        xw = jnp.dot(x_ref[...], w_ref[...],
                     preferred_element_type=jnp.float32)
        acc_ref[...] += jnp.dot(a_ref[...], xw.astype(a_ref.dtype),
                                preferred_element_type=jnp.float32)

    @pl.when(k == nk - 1)
    def _finalize():
        # Bias + ReLU once per output tile.  NOTE: padded node rows end up as
        # relu(bias) != 0; this is harmless because A_hat columns and pool
        # columns for padded nodes are zero, and node_rep is sliced to :n.
        h = jnp.maximum(acc_ref[...] + b_ref[...], 0.0)
        h_ref[...] = h.astype(h_ref.dtype)
        # Fused sum-pool contribution of this row stripe, kept in f32.
        pool_ref[...] = jnp.dot(p_ref[...].astype(jnp.float32), h,
                                preferred_element_type=jnp.float32)


def gcn_layer(tbl, cnt, a_hat, x, w, bias, pool_mat, *, tm, tn, tk, nk_slots,
              nnz_blocks):
    n_pad = a_hat.shape[0]
    in_pad = x.shape[1]
    hid_pad = w.shape[1]
    g_pad = pool_mat.shape[0]
    ni, nj = n_pad // tm, hid_pad // tn

    # Data-dependent index maps: the compacted block table (SMEM) selects which
    # A_hat / X k-blocks are DMA'd, so zero tiles never touch HBM bandwidth.
    def a_map(i, j, k, tbl_ref, cnt_ref):
        return (i, tbl_ref[i * nk_slots + k])

    def x_map(i, j, k, tbl_ref, cnt_ref):
        return (tbl_ref[i * nk_slots + k], 0)

    bytes_per = jnp.dtype(a_hat.dtype).itemsize
    cost = pl.CostEstimate(
        flops=(2 * nj * nnz_blocks * (tk * in_pad * tn + tm * tk * tn)
               + 2 * ni * nj * g_pad * tm * tn),
        transcendentals=0,
        bytes_accessed=(nj * nnz_blocks * (tm * tk + tk * in_pad) * bytes_per
                        + in_pad * hid_pad * bytes_per
                        + n_pad * hid_pad * bytes_per
                        + ni * g_pad * hid_pad * 4
                        + ni * g_pad * tm * bytes_per
                        + hid_pad * 4))

    grid_spec = pltpu.PrefetchScalarGridSpec(
        num_scalar_prefetch=2,
        grid=(ni, nj, nk_slots),
        in_specs=[
            pl.BlockSpec((tm, tk), a_map),                              # A_hat block
            pl.BlockSpec((tk, in_pad), x_map),                          # X k-stripe
            pl.BlockSpec((in_pad, tn), lambda i, j, k, t, c: (0, j)),   # W (VMEM-resident)
            pl.BlockSpec((1, tn), lambda i, j, k, t, c: (0, j)),        # bias
            pl.BlockSpec((g_pad, tm), lambda i, j, k, t, c: (0, i)),    # pool matrix
        ],
        out_specs=[
            pl.BlockSpec((tm, tn), lambda i, j, k, t, c: (i, j)),       # H tile
            pl.BlockSpec((g_pad, tn), lambda i, j, k, t, c: (i, j)),    # partial pool
        ],
        scratch_shapes=[pltpu.VMEM((tm, tn), jnp.float32)],
    )

    return pl.pallas_call(
        _gcn_layer_kernel,
        grid_spec=grid_spec,
        out_shape=(jax.ShapeDtypeStruct((n_pad, hid_pad), a_hat.dtype),
                   jax.ShapeDtypeStruct((ni * g_pad, hid_pad), jnp.float32)),
        compiler_params=pltpu.CompilerParams(
            dimension_semantics=("parallel", "parallel", "arbitrary"),
            vmem_limit_bytes=_vmem_limit_bytes()),
        cost_estimate=cost,
    )(tbl, cnt, a_hat, x, w, bias, pool_mat)


# ---------------------------------------------------------------------------
# Glue: normalized adjacency, compacted block table, pooling matrix, padding
# ---------------------------------------------------------------------------
def build_norm_adj(edge_index, num_nodes):
    row, col = edge_index[0], edge_index[1]              # row=source, col=target
    loop = jnp.arange(num_nodes, dtype=edge_index.dtype)
    row = jnp.concatenate([row, loop])                   # add_self_loops=True
    col = jnp.concatenate([col, loop])
    w = jnp.ones(row.shape[0], dtype=jnp.float32)
    deg = jnp.zeros(num_nodes, jnp.float32).at[col].add(w)
    deg_inv_sqrt = jnp.where(deg > 0.0, 1.0 / jnp.sqrt(deg), 0.0)
    norm = deg_inv_sqrt[row] * w * deg_inv_sqrt[col]
    a_hat = jnp.zeros((num_nodes, num_nodes), jnp.float32).at[col, row].add(norm)
    return a_hat


def _build_block_table(a_pad_np, tm, tk):
    """Compacted per-row-stripe table of nonzero k-blocks (host side)."""
    n_pad = a_pad_np.shape[0]
    ni, nkb = n_pad // tm, n_pad // tk
    blocks = a_pad_np.reshape(ni, tm, nkb, tk)
    mask = np.abs(blocks).sum(axis=(1, 3)) > 0.0          # (ni, nkb)
    counts = mask.sum(axis=1).astype(np.int32)            # (ni,)
    nk_slots = max(1, int(counts.max()))
    tbl = np.zeros((ni, nk_slots), np.int32)
    for i in range(ni):
        ks = np.nonzero(mask[i])[0]
        tbl[i, :len(ks)] = ks
        if 0 < len(ks) < nk_slots:
            tbl[i, len(ks):] = ks[-1]      # benign repeat; MXU-masked in-kernel
    return tbl.reshape(-1), counts, nk_slots, int(counts.sum())


def init_params(key, feat_dim, hidden_dim, n_layers):
    # xavier_uniform_ on weights, bias filled with 0.0 (matches weights_init)
    params = []
    for i in range(n_layers):
        start_dim = hidden_dim if i else feat_dim
        key, sub = jax.random.split(key)
        bound = jnp.sqrt(6.0 / (start_dim + hidden_dim))
        w = jax.random.uniform(sub, (start_dim, hidden_dim), jnp.float32,
                               minval=-bound, maxval=bound)
        b = jnp.zeros((hidden_dim,), jnp.float32)
        params.append((w, b))
    return params


@functools.partial(jax.jit,
                   static_argnames=("num_graphs", "hidden_dim", "n",
                                    "tm", "tn", "tk", "nk_slots", "nnz_blocks"))
def _forward_padded(x_pad, a_pad, pool_mat, tbl, cnt, params, *,
                    num_graphs, hidden_dim, n, tm, tn, tk, nk_slots, nnz_blocks):
    n_pad = a_pad.shape[0]
    hid_pad = _round_up(hidden_dim, 128)
    g_pad = pool_mat.shape[0]
    ni = n_pad // tm

    h = x_pad
    pools = []
    for (w, b) in params:
        in_dim = w.shape[0]
        in_pad = h.shape[1]
        w_pad = jnp.zeros((in_pad, hid_pad), jnp.float32)
        w_pad = w_pad.at[:in_dim, :hidden_dim].set(w).astype(h.dtype)
        b_pad = jnp.zeros((1, hid_pad), jnp.float32).at[0, :hidden_dim].set(b)

        h, pool_partial = gcn_layer(tbl, cnt, a_pad, h, w_pad, b_pad, pool_mat,
                                    tm=tm, tn=tn, tk=tk, nk_slots=nk_slots,
                                    nnz_blocks=nnz_blocks)
        pooled = pool_partial.reshape(ni, g_pad, hid_pad).sum(axis=0)
        pools.append(pooled[:num_graphs, :hidden_dim])

    global_rep = jnp.concatenate(pools, axis=1)
    node_rep = h[:n, :hidden_dim].astype(jnp.float32)
    return global_rep, node_rep


def gcn_forward(x, edge_index, batch, params, *, num_graphs):
    """Pallas GCN forward.  Graph-structure preprocessing (normalized adjacency,
    compacted nonzero-block table, padding) runs eagerly on the host because the
    compacted table fixes the static grid k-extent; the padded per-layer compute
    is jitted and runs as one fused Pallas kernel per layer."""
    n, feat_dim = x.shape
    hidden_dim = params[0][0].shape[1]

    # ---- static tile / padding choices --------------------------------------
    n_pad0 = _round_up(n, 128)
    if n_pad0 <= 128:
        tm = 128
    elif n_pad0 <= 1024:
        # keep >= 2 row stripes so the grid shards across v7x's 2 TensorCores
        tm = max(128, _round_up(n_pad0 // 2, 128))
    else:
        tm = 512
    tk = tm
    n_pad = _round_up(n_pad0, tm)
    hid_pad = _round_up(hidden_dim, 128)
    # full hidden width per grid step -> lane-dense H stores, no j re-reads
    tn = hid_pad if hid_pad <= 512 else (256 if hid_pad % 256 == 0 else 128)
    feat_pad = _round_up(feat_dim, 128)
    g_pad = _round_up(num_graphs, 8)

    # ---- normalized adjacency (dense, padded) + compacted block table -------
    a_hat = np.asarray(build_norm_adj(edge_index, n), dtype=np.float32)
    a_pad = np.zeros((n_pad, n_pad), np.float32)
    a_pad[:n, :n] = a_hat
    tbl, cnt, nk_slots, nnz_blocks = _build_block_table(a_pad, tm, tk)

    # ---- sum-pool matrix; padded nodes map to no graph (zero columns) -------
    batch_np = np.asarray(batch).astype(np.int64)
    pool_mat = np.zeros((g_pad, n_pad), np.float32)
    pool_mat[batch_np, np.arange(n)] = 1.0

    # ---- padded node features ------------------------------------------------
    x_pad = jnp.zeros((n_pad, feat_pad), jnp.float32).at[:n, :feat_dim].set(x)

    return _forward_padded(
        x_pad.astype(_COMPUTE_DTYPE),
        jnp.asarray(a_pad, dtype=_COMPUTE_DTYPE),
        jnp.asarray(pool_mat, dtype=_COMPUTE_DTYPE),
        jnp.asarray(tbl), jnp.asarray(cnt),
        params,
        num_graphs=num_graphs, hidden_dim=hidden_dim, n=n,
        tm=tm, tn=tn, tk=tk, nk_slots=nk_slots, nnz_blocks=nnz_blocks)


def gcn_forward_reference(x, edge_index, batch, params, num_graphs):
    # plain-JAX f32 reference for a sanity check
    a_hat = build_norm_adj(edge_index, x.shape[0])
    pool_mat = jax.nn.one_hot(batch, num_graphs, dtype=jnp.float32).T
    h = x
    pools = []
    for w, b in params:
        h = jnp.maximum(a_hat @ (h @ w) + b[None, :], 0.0)
        pools.append(pool_mat @ h)
    return jnp.concatenate(pools, axis=1), h


# ---------------------------------------------------------------------------
if __name__ == "__main__":
    key = jax.random.PRNGKey(0)

    N = 16            # total nodes (2 graphs x 8 nodes)
    FEAT_DIM = 8
    HIDDEN_DIM = 32
    N_LAYERS = 3
    NUM_GRAPHS = 2

    key, kx, kp = jax.random.split(key, 3)
    x = jax.random.normal(kx, (N, FEAT_DIM), jnp.float32)

    # two ring graphs of 8 nodes each, bidirectional edges
    srcs, dsts = [], []
    for g in range(NUM_GRAPHS):
        off = g * 8
        for i in range(8):
            u, v = off + i, off + (i + 1) % 8
            srcs += [u, v]
            dsts += [v, u]
    edge_index = jnp.array([srcs, dsts], dtype=jnp.int32)             # [2, E]
    batch = jnp.repeat(jnp.arange(NUM_GRAPHS, dtype=jnp.int32), 8)    # [N]

    params = init_params(kp, FEAT_DIM, HIDDEN_DIM, N_LAYERS)

    global_rep, node_rep = gcn_forward(x, edge_index, batch, params,
                                       num_graphs=NUM_GRAPHS)
    jax.block_until_ready((global_rep, node_rep))

    assert global_rep.shape == (NUM_GRAPHS, HIDDEN_DIM * N_LAYERS)
    assert node_rep.shape == (N, HIDDEN_DIM)

    # numerical sanity check vs plain-JAX f32 reference (bf16 tolerance)
    ref_global, ref_node = gcn_forward_reference(x, edge_index, batch, params,
                                                 NUM_GRAPHS)
    assert bool(jnp.allclose(global_rep, ref_global, rtol=5e-2, atol=5e-2))
    assert bool(jnp.allclose(node_rep, ref_node, rtol=5e-2, atol=5e-2))

    print("KERNEL_OK")
</pallas_src>

<mosaic_0001>
module attributes {stable_mosaic.version = 11 : i64} {
  func.func @_gcn_layer_kernel(%arg0: i32, %arg1: i32, %arg2: i32, %arg3: memref<1xi32, #tpu.memory_space<smem>>, %arg4: memref<1xi32, #tpu.memory_space<smem>>, %arg5: memref<128x128xf32, #tpu.memory_space<vmem>>, %arg6: memref<128x128xf32, #tpu.memory_space<vmem>>, %arg7: memref<128x128xf32, #tpu.memory_space<vmem>>, %arg8: memref<1x128xf32, #tpu.memory_space<vmem>>, %arg9: memref<8x128xf32, #tpu.memory_space<vmem>>, %arg10: memref<128x128xf32, #tpu.memory_space<vmem>>, %arg11: memref<8x128xf32, #tpu.memory_space<vmem>>, %arg12: memref<128x128xf32, #tpu.memory_space<vmem>>) attributes {dimension_semantics = [#tpu.dimension_semantics<parallel>, #tpu.dimension_semantics<parallel>, #tpu.dimension_semantics<arbitrary>], iteration_bounds = array<i64: 1, 1, 1>, scalar_prefetch = 2 : i64, scratch_operands = 1 : i64, tpu.core_type = #tpu.core_type<tc>, window_params = [{transform_indices = @transform_0, window_bounds = array<i64: 128, 128>}, {transform_indices = @transform_1, window_bounds = array<i64: 128, 128>}, {transform_indices = @transform_2, window_bounds = array<i64: 128, 128>}, {transform_indices = @transform_3, window_bounds = array<i64: 1, 128>}, {transform_indices = @transform_4, window_bounds = array<i64: 8, 128>}, {transform_indices = @transform_5, window_bounds = array<i64: 128, 128>}, {transform_indices = @transform_6, window_bounds = array<i64: 8, 128>}]} {
    %c0_i32 = arith.constant 0 : i32
    %0 = arith.cmpi eq, %arg2, %c0_i32 : i32
    %1 = arith.extui %0 : i1 to i32
    %c0_i32_0 = arith.constant 0 : i32
    %2 = arith.cmpi ne, %1, %c0_i32_0 : i32
    scf.if %2 {
      %cst = arith.constant 0.000000e+00 : f32
      %11 = vector.broadcast %cst : f32 to vector<128x128xf32>
      %c0 = arith.constant 0 : index
      %c0_4 = arith.constant 0 : index
      %12 = vector.load %arg12[%c0, %c0_4] : memref<128x128xf32, #tpu.memory_space<vmem>>, vector<128x128xf32>
      tpu.vector_store %arg12[%c0, %c0_4], %11 {strides = array<i32>} : memref<128x128xf32, #tpu.memory_space<vmem>>, vector<128x128xf32>,
    } else {
    }
    %3 = arith.index_cast %arg0 : i32 to index
    %4 = memref.load %arg4[%3] : memref<1xi32, #tpu.memory_space<smem>>
    %5 = arith.cmpi slt, %arg2, %4 : i32
    %6 = arith.extui %5 : i1 to i32
    %c0_i32_1 = arith.constant 0 : i32
    %7 = arith.cmpi ne, %6, %c0_i32_1 : i32
    scf.if %7 {
      %c0 = arith.constant 0 : index
      %c0_4 = arith.constant 0 : index
      %11 = vector.load %arg6[%c0, %c0_4] : memref<128x128xf32, #tpu.memory_space<vmem>>, vector<128x128xf32>
      %c0_5 = arith.constant 0 : index
      %c0_6 = arith.constant 0 : index
      %12 = vector.load %arg7[%c0_5, %c0_6] : memref<128x128xf32, #tpu.memory_space<vmem>>, vector<128x128xf32>
      %cst = arith.constant dense<0.000000e+00> : vector<128x128xf32>
      %13 = tpu.matmul %11, %12, %cst {dimension_numbers = #tpu.dot_dimension_numbers<[1], [0], [0], [1], [0, 0, 1, 1], [], []>} : vector<128x128xf32>, vector<128x128xf32>, vector<128x128xf32> -> vector<128x128xf32>
      %c0_7 = arith.constant 0 : index
      %c0_8 = arith.constant 0 : index
      %14 = vector.load %arg12[%c0_7, %c0_8] : memref<128x128xf32, #tpu.memory_space<vmem>>, vector<128x128xf32>
      %c0_9 = arith.constant 0 : index
      %c0_10 = arith.constant 0 : index
      %15 = vector.load %arg5[%c0_9, %c0_10] : memref<128x128xf32, #tpu.memory_space<vmem>>, vector<128x128xf32>
      %cst_11 = arith.constant dense<0.000000e+00> : vector<128x128xf32>
      %16 = tpu.matmul %15, %13, %cst_11 {dimension_numbers = #tpu.dot_dimension_numbers<[1], [0], [0], [1], [0, 0, 1, 1], [], []>} : vector<128x128xf32>, vector<128x128xf32>, vector<128x128xf32> -> vector<128x128xf32>
      %17 = arith.addf %14, %16 : vector<128x128xf32>
      %c0_12 = arith.constant 0 : index
      %c0_13 = arith.constant 0 : index
      %18 = vector.load %arg12[%c0_12, %c0_13] : memref<128x128xf32, #tpu.memory_space<vmem>>, vector<128x128xf32>
      tpu.vector_store %arg12[%c0_12, %c0_13], %17 {strides = array<i32>} : memref<128x128xf32, #tpu.memory_space<vmem>>, vector<128x128xf32>,
    } else {
    }
    %c0_i32_2 = arith.constant 0 : i32
    %8 = arith.cmpi eq, %arg2, %c0_i32_2 : i32
    %9 = arith.extui %8 : i1 to i32
    %c0_i32_3 = arith.constant 0 : i32
    %10 = arith.cmpi ne, %9, %c0_i32_3 : i32
    scf.if %10 {
      %c0 = arith.constant 0 : index
      %c0_4 = arith.constant 0 : index
      %11 = vector.load %arg12[%c0, %c0_4] : memref<128x128xf32, #tpu.memory_space<vmem>>, vector<128x128xf32>
      %c0_5 = arith.constant 0 : index
      %c0_6 = arith.constant 0 : index
      %12 = vector.load %arg8[%c0_5, %c0_6] : memref<1x128xf32, #tpu.memory_space<vmem>>, vector<1x128xf32>
      %13 = vector.broadcast %12 : vector<1x128xf32> to vector<128x128xf32>
      %14 = arith.addf %11, %13 : vector<128x128xf32>
      %cst = arith.constant 0.000000e+00 : f32
      %15 = vector.broadcast %cst : f32 to vector<128x128xf32>
      %16 = arith.maximumf %14, %15 : vector<128x128xf32>
      %c0_7 = arith.constant 0 : index
      %c0_8 = arith.constant 0 : index
      %17 = vector.load %arg10[%c0_7, %c0_8] : memref<128x128xf32, #tpu.memory_space<vmem>>, vector<128x128xf32>
      tpu.vector_store %arg10[%c0_7, %c0_8], %16 {strides = array<i32>} : memref<128x128xf32, #tpu.memory_space<vmem>>, vector<128x128xf32>,
      %c0_9 = arith.constant 0 : index
      %c0_10 = arith.constant 0 : index
      %18 = vector.load %arg9[%c0_9, %c0_10] : memref<8x128xf32, #tpu.memory_space<vmem>>, vector<8x128xf32>
      %cst_11 = arith.constant dense<0.000000e+00> : vector<8x128xf32>
      %19 = tpu.matmul %18, %16, %cst_11 {dimension_numbers = #tpu.dot_dimension_numbers<[1], [0], [0], [1], [0, 0, 1, 1], [], []>} : vector<8x128xf32>, vector<128x128xf32>, vector<8x128xf32> -> vector<8x128xf32>
      %c0_12 = arith.constant 0 : index
      %c0_13 = arith.constant 0 : index
      %20 = vector.load %arg11[%c0_12, %c0_13] : memref<8x128xf32, #tpu.memory_space<vmem>>, vector<8x128xf32>
      tpu.vector_store %arg11[%c0_12, %c0_13], %19 {strides = array<i32>} : memref<8x128xf32, #tpu.memory_space<vmem>>, vector<8x128xf32>,
    } else {
    }
    return
  }
  func.func @transform_0(%arg0: i32, %arg1: i32, %arg2: i32, %arg3: memref<1xi32, #tpu.memory_space<smem>>, %arg4: memref<1xi32, #tpu.memory_space<smem>>) -> (i32, i32) {
    %c1_i32 = arith.constant 1 : i32
    %0 = arith.muli %arg0, %c1_i32 : i32
    %1 = arith.addi %0, %arg2 : i32
    %2 = arith.index_cast %1 : i32 to index
    %3 = memref.load %arg3[%2] : memref<1xi32, #tpu.memory_space<smem>>
    %c0_i32 = arith.constant 0 : i32
    return %arg0, %3 : i32, i32
  }
  func.func @transform_1(%arg0: i32, %arg1: i32, %arg2: i32, %arg3: memref<1xi32, #tpu.memory_space<smem>>, %arg4: memref<1xi32, #tpu.memory_space<smem>>) -> (i32, i32) {
    %c1_i32 = arith.constant 1 : i32
    %0 = arith.muli %arg0, %c1_i32 : i32
    %1 = arith.addi %0, %arg2 : i32
    %2 = arith.index_cast %1 : i32 to index
    %3 = memref.load %arg3[%2] : memref<1xi32, #tpu.memory_space<smem>>
    %c0_i32 = arith.constant 0 : i32
    %c0_i32_0 = arith.constant 0 : i32
    return %3, %c0_i32 : i32, i32
  }
  func.func @transform_2(%arg0: i32, %arg1: i32, %arg2: i32, %arg3: memref<1xi32, #tpu.memory_space<smem>>, %arg4: memref<1xi32, #tpu.memory_space<smem>>) -> (i32, i32) {
    %c0_i32 = arith.constant 0 : i32
    %c0_i32_0 = arith.constant 0 : i32
    return %c0_i32, %arg1 : i32, i32
  }
  func.func @transform_3(%arg0: i32, %arg1: i32, %arg2: i32, %arg3: memref<1xi32, #tpu.memory_space<smem>>, %arg4: memref<1xi32, #tpu.memory_space<smem>>) -> (i32, i32) {
    %c0_i32 = arith.constant 0 : i32
    %c0_i32_0 = arith.constant 0 : i32
    return %c0_i32, %arg1 : i32, i32
  }
  func.func @transform_4(%arg0: i32, %arg1: i32, %arg2: i32, %arg3: memref<1xi32, #tpu.memory_space<smem>>, %arg4: memref<1xi32, #tpu.memory_space<smem>>) -> (i32, i32) {
    %c0_i32 = arith.constant 0 : i32
    %c0_i32_0 = arith.constant 0 : i32
    return %c0_i32, %arg0 : i32, i32
  }
  func.func @transform_5(%arg0: i32, %arg1: i32, %arg2: i32, %arg3: memref<1xi32, #tpu.memory_space<smem>>, %arg4: memref<1xi32, #tpu.memory_space<smem>>) -> (i32, i32) {
    %c0_i32 = arith.constant 0 : i32
    return %arg0, %arg1 : i32, i32
  }
  func.func @transform_6(%arg0: i32, %arg1: i32, %arg2: i32, %arg3: memref<1xi32, #tpu.memory_space<smem>>, %arg4: memref<1xi32, #tpu.memory_space<smem>>) -> (i32, i32) {
    %c0_i32 = arith.constant 0 : i32
    return %arg0, %arg1 : i32, i32
  }
}

module attributes {stable_mosaic.version = 11 : i64} {
  func.func @_gcn_layer_kernel(%arg0: i32, %arg1: i32, %arg2: i32, %arg3: memref<1xi32, #tpu.memory_space<smem>>, %arg4: memref<1xi32, #tpu.memory_space<smem>>, %arg5: memref<128x128xf32, #tpu.memory_space<vmem>>, %arg6: memref<128x128xf32, #tpu.memory_space<vmem>>, %arg7: memref<128x128xf32, #tpu.memory_space<vmem>>, %arg8: memref<1x128xf32, #tpu.memory_space<vmem>>, %arg9: memref<8x128xf32, #tpu.memory_space<vmem>>, %arg10: memref<128x128xf32, #tpu.memory_space<vmem>>, %arg11: memref<8x128xf32, #tpu.memory_space<vmem>>, %arg12: memref<128x128xf32, #tpu.memory_space<vmem>>) attributes {dimension_semantics = [#tpu.dimension_semantics<parallel>, #tpu.dimension_semantics<parallel>, #tpu.dimension_semantics<arbitrary>], iteration_bounds = array<i64: 1, 1, 1>, scalar_prefetch = 2 : i64, scratch_operands = 1 : i64, tpu.core_type = #tpu.core_type<tc>, window_params = [{transform_indices = @transform_0, window_bounds = array<i64: 128, 128>}, {transform_indices = @transform_1, window_bounds = array<i64: 128, 128>}, {transform_indices = @transform_2, window_bounds = array<i64: 128, 128>}, {transform_indices = @transform_3, window_bounds = array<i64: 1, 128>}, {transform_indices = @transform_4, window_bounds = array<i64: 8, 128>}, {transform_indices = @transform_5, window_bounds = array<i64: 128, 128>}, {transform_indices = @transform_6, window_bounds = array<i64: 8, 128>}]} {
    %c0_i32 = arith.constant 0 : i32
    %0 = arith.cmpi eq, %arg2, %c0_i32 : i32
    %1 = arith.extui %0 : i1 to i32
    %c0_i32_0 = arith.constant 0 : i32
    %2 = arith.cmpi ne, %1, %c0_i32_0 : i32
    scf.if %2 {
      %cst = arith.constant 0.000000e+00 : f32
      %11 = vector.broadcast %cst : f32 to vector<128x128xf32>
      %c0 = arith.constant 0 : index
      %c0_4 = arith.constant 0 : index
      %12 = vector.load %arg12[%c0, %c0_4] : memref<128x128xf32, #tpu.memory_space<vmem>>, vector<128x128xf32>
      tpu.vector_store %arg12[%c0, %c0_4], %11 {strides = array<i32>} : memref<128x128xf32, #tpu.memory_space<vmem>>, vector<128x128xf32>,
    } else {
    }
    %3 = arith.index_cast %arg0 : i32 to index
    %4 = memref.load %arg4[%3] : memref<1xi32, #tpu.memory_space<smem>>
    %5 = arith.cmpi slt, %arg2, %4 : i32
    %6 = arith.extui %5 : i1 to i32
    %c0_i32_1 = arith.constant 0 : i32
    %7 = arith.cmpi ne, %6, %c0_i32_1 : i32
    scf.if %7 {
      %c0 = arith.constant 0 : index
      %c0_4 = arith.constant 0 : index
      %11 = vector.load %arg6[%c0, %c0_4] : memref<128x128xf32, #tpu.memory_space<vmem>>, vector<128x128xf32>
      %c0_5 = arith.constant 0 : index
      %c0_6 = arith.constant 0 : index
      %12 = vector.load %arg7[%c0_5, %c0_6] : memref<128x128xf32, #tpu.memory_space<vmem>>, vector<128x128xf32>
      %cst = arith.constant dense<0.000000e+00> : vector<128x128xf32>
      %13 = tpu.matmul %11, %12, %cst {dimension_numbers = #tpu.dot_dimension_numbers<[1], [0], [0], [1], [0, 0, 1, 1], [], []>} : vector<128x128xf32>, vector<128x128xf32>, vector<128x128xf32> -> vector<128x128xf32>
      %c0_7 = arith.constant 0 : index
      %c0_8 = arith.constant 0 : index
      %14 = vector.load %arg12[%c0_7, %c0_8] : memref<128x128xf32, #tpu.memory_space<vmem>>, vector<128x128xf32>
      %c0_9 = arith.constant 0 : index
      %c0_10 = arith.constant 0 : index
      %15 = vector.load %arg5[%c0_9, %c0_10] : memref<128x128xf32, #tpu.memory_space<vmem>>, vector<128x128xf32>
      %cst_11 = arith.constant dense<0.000000e+00> : vector<128x128xf32>
      %16 = tpu.matmul %15, %13, %cst_11 {dimension_numbers = #tpu.dot_dimension_numbers<[1], [0], [0], [1], [0, 0, 1, 1], [], []>} : vector<128x128xf32>, vector<128x128xf32>, vector<128x128xf32> -> vector<128x128xf32>
      %17 = arith.addf %14, %16 : vector<128x128xf32>
      %c0_12 = arith.constant 0 : index
      %c0_13 = arith.constant 0 : index
      %18 = vector.load %arg12[%c0_12, %c0_13] : memref<128x128xf32, #tpu.memory_space<vmem>>, vector<128x128xf32>
      tpu.vector_store %arg12[%c0_12, %c0_13], %17 {strides = array<i32>} : memref<128x128xf32, #tpu.memory_space<vmem>>, vector<128x128xf32>,
    } else {
    }
    %c0_i32_2 = arith.constant 0 : i32
    %8 = arith.cmpi eq, %arg2, %c0_i32_2 : i32
    %9 = arith.extui %8 : i1 to i32
    %c0_i32_3 = arith.constant 0 : i32
    %10 = arith.cmpi ne, %9, %c0_i32_3 : i32
    scf.if %10 {
      %c0 = arith.constant 0 : index
      %c0_4 = arith.constant 0 : index
      %11 = vector.load %arg12[%c0, %c0_4] : memref<128x128xf32, #tpu.memory_space<vmem>>, vector<128x128xf32>
      %c0_5 = arith.constant 0 : index
      %c0_6 = arith.constant 0 : index
      %12 = vector.load %arg8[%c0_5, %c0_6] : memref<1x128xf32, #tpu.memory_space<vmem>>, vector<1x128xf32>
      %13 = vector.broadcast %12 : vector<1x128xf32> to vector<128x128xf32>
      %14 = arith.addf %11, %13 : vector<128x128xf32>
      %cst = arith.constant 0.000000e+00 : f32
      %15 = vector.broadcast %cst : f32 to vector<128x128xf32>
      %16 = arith.maximumf %14, %15 : vector<128x128xf32>
      %c0_7 = arith.constant 0 : index
      %c0_8 = arith.constant 0 : index
      %17 = vector.load %arg10[%c0_7, %c0_8] : memref<128x128xf32, #tpu.memory_space<vmem>>, vector<128x128xf32>
      tpu.vector_store %arg10[%c0_7, %c0_8], %16 {strides = array<i32>} : memref<128x128xf32, #tpu.memory_space<vmem>>, vector<128x128xf32>,
      %c0_9 = arith.constant 0 : index
      %c0_10 = arith.constant 0 : index
      %18 = vector.load %arg9[%c0_9, %c0_10] : memref<8x128xf32, #tpu.memory_space<vmem>>, vector<8x128xf32>
      %cst_11 = arith.constant dense<0.000000e+00> : vector<8x128xf32>
      %19 = tpu.matmul %18, %16, %cst_11 {dimension_numbers = #tpu.dot_dimension_numbers<[1], [0], [0], [1], [0, 0, 1, 1], [], []>} : vector<8x128xf32>, vector<128x128xf32>, vector<8x128xf32> -> vector<8x128xf32>
      %c0_12 = arith.constant 0 : index
      %c0_13 = arith.constant 0 : index
      %20 = vector.load %arg11[%c0_12, %c0_13] : memref<8x128xf32, #tpu.memory_space<vmem>>, vector<8x128xf32>
      tpu.vector_store %arg11[%c0_12, %c0_13], %19 {strides = array<i32>} : memref<8x128xf32, #tpu.memory_space<vmem>>, vector<8x128xf32>,
    } else {
    }
    return
  }
  func.func @transform_0(%arg0: i32, %arg1: i32, %arg2: i32, %arg3: memref<1xi32, #tpu.memory_space<smem>>, %arg4: memref<1xi32, #tpu.memory_space<smem>>) -> (i32, i32) {
    %c1_i32 = arith.constant 1 : i32
    %0 = arith.muli %arg0, %c1_i32 : i32
    %1 = arith.addi %0, %arg2 : i32
    %2 = arith.index_cast %1 : i32 to index
    %3 = memref.load %arg3[%2] : memref<1xi32, #tpu.memory_space<smem>>
    %c0_i32 = arith.constant 0 : i32
    return %arg0, %3 : i32, i32
  }
  func.func @transform_1(%arg0: i32, %arg1: i32, %arg2: i32, %arg3: memref<1xi32, #tpu.memory_space<smem>>, %arg4: memref<1xi32, #tpu.memory_space<smem>>) -> (i32, i32) {
    %c1_i32 = arith.constant 1 : i32
    %0 = arith.muli %arg0, %c1_i32 : i32
    %1 = arith.addi %0, %arg2 : i32
    %2 = arith.index_cast %1 : i32 to index
    %3 = memref.load %arg3[%2] : memref<1xi32, #tpu.memory_space<smem>>
    %c0_i32 = arith.constant 0 : i32
    %c0_i32_0 = arith.constant 0 : i32
    return %3, %c0_i32 : i32, i32
  }
  func.func @transform_2(%arg0: i32, %arg1: i32, %arg2: i32, %arg3: memref<1xi32, #tpu.memory_space<smem>>, %arg4: memref<1xi32, #tpu.memory_space<smem>>) -> (i32, i32) {
    %c0_i32 = arith.constant 0 : i32
    %c0_i32_0 = arith.constant 0 : i32
    return %c0_i32, %arg1 : i32, i32
  }
  func.func @transform_3(%arg0: i32, %arg1: i32, %arg2: i32, %arg3: memref<1xi32, #tpu.memory_space<smem>>, %arg4: memref<1xi32, #tpu.memory_space<smem>>) -> (i32, i32) {
    %c0_i32 = arith.constant 0 : i32
    %c0_i32_0 = arith.constant 0 : i32
    return %c0_i32, %arg1 : i32, i32
  }
  func.func @transform_4(%arg0: i32, %arg1: i32, %arg2: i32, %arg3: memref<1xi32, #tpu.memory_space<smem>>, %arg4: memref<1xi32, #tpu.memory_space<smem>>) -> (i32, i32) {
    %c0_i32 = arith.constant 0 : i32
    %c0_i32_0 = arith.constant 0 : i32
    return %c0_i32, %arg0 : i32, i32
  }
  func.func @transform_5(%arg0: i32, %arg1: i32, %arg2: i32, %arg3: memref<1xi32, #tpu.memory_space<smem>>, %arg4: memref<1xi32, #tpu.memory_space<smem>>) -> (i32, i32) {
    %c0_i32 = arith.constant 0 : i32
    return %arg0, %arg1 : i32, i32
  }
  func.func @transform_6(%arg0: i32, %arg1: i32, %arg2: i32, %arg3: memref<1xi32, #tpu.memory_space<smem>>, %arg4: memref<1xi32, #tpu.memory_space<smem>>) -> (i32, i32) {
    %c0_i32 = arith.constant 0 : i32
    return %arg0, %arg1 : i32, i32
  }
}

</mosaic_0001>

<llo_original>
// kernel: _forward_padded.3
$region0: #{_forward_padded.3}
  #allocation0 [shape = 'u32[]', space=smem, size = 0x4, offset = 0x4, fixed_abs, tag = 'smem constant byte address 0x4 - core index']
  #allocation1 [shape = 'u32[72,128]{1,0:T(1,128)}', space=vmem, size = 0x9000, scoped, tag = 'internal scratch']
  #allocation2 [shape = 'f32[128,128]{1,0:T(8,128)}', space=vmem, size = 0x10000, scoped, tag = 'scratch operand']
  #allocation3 [shape = 's32[1]{0}', space=sflag, size = 0x4, scoped, tag = 'scoped memory for _forward_padded.3']
  #allocation4 [shape = 's32[1]{0:T(128)S(6)}', space=smem, size = 0x200, scoped, tag = 'prefetched SMEM operand 0']
  #allocation5 [shape = 's32[1]{0:T(128)S(6)}', space=smem, size = 0x200, scoped, tag = 'prefetched SMEM operand 1']
  %s0 = inlined_call_operand.<no memory space> [shape: s32[1], index: 0, kind: input, shape index: {}]
  %s1 = inlined_call_operand.<no memory space> [shape: s32[1], index: 1, kind: input, shape index: {}]
  %s2 = inlined_call_operand.vmem [shape: f32[128,128], index: 2, kind: input, shape index: {}]
  %s3 = inlined_call_operand.hbm [shape: f32[128,128], index: 3, kind: input, shape index: {}]
  %s4 = inlined_call_operand.vmem [shape: f32[128,128], index: 4, kind: input, shape index: {}]
  %s5 = inlined_call_operand.vmem [shape: f32[1,128], index: 5, kind: input, shape index: {}]
  %s6 = inlined_call_operand.vmem [shape: f32[8,128], index: 6, kind: input, shape index: {}]
  %s7 = inlined_call_operand.vmem [shape: f32[128,128], index: 7, kind: output, shape index: {0}]
  %s8 = inlined_call_operand.vmem [shape: f32[8,128], index: 8, kind: output, shape index: {1}]
  %9 = xla_tuple %s7, %s8
  %s10 = sld [smem:[#allocation0]]
  $region54: #{_forward_padded.3} parent=0
    _
  %s12 = ssub.s32 1, %s10
  %s13 = scalar_select 0, %s12, %s10
  %14 = sst [smem:[#allocation4]] %s0
  %15 = sst [smem:[#allocation5]] %s1
  $region1: #{_forward_padded.3} parent=0
    #allocation6 [shape = 'u8[65536]{0}', space=vmem, size = 0x10000, scoped, tag = 'input window, operand 3, single buffered']
    #allocation7 [shape = 's32[1]{0}', space=sflag, size = 0x4, scoped, tag = 'scoped memory for _forward_padded.3']
    %16 = vsyncpa [#allocation7], 0
    // Predicated region
    $region2: #{_forward_padded.3} parent=1 // pred_check
      _
    $region3: #{_forward_padded.3} parent=1 // pred_check_branch
      %18 = sbr.rel (0) target = $region5
    $region4: #{_forward_padded.3} parent=1 // pred_region
      %s19 = sadd.s32 0, 0
      %s20 = sld [smem:[#allocation4 + %s19]]
      %p21 = scmp.lt.s32.totalorder %s20, 0
      %s22 = scalar_select %p21, %s20, 0
      %s23 = smul.addr %s22, 8
      %s24 = scalar_lea.vmem %s2, %s23
      %s25 = sadd.s32 0, 0
      %s26 = sld [smem:[#allocation4 + %s25]]
    $region5: #{_forward_padded.3} parent=1 // pred_fallthru
      _
    // Predicated region
    $region6: #{_forward_padded.3} parent=1 // pred_check
      _
    $region7: #{_forward_padded.3} parent=1 // pred_check_branch
      %28 = sbr.rel (0) target = $region9
    $region8: #{_forward_padded.3} parent=1 // pred_region
      %s29 = sadd.s32 0, 0
      %s30 = sld [smem:[#allocation4 + %s29]]
      %s31 = smul.u32 16, %s30
      %33 = vsyncadd [#allocation7], 0
      %s34 = smul.addr %s31, 8
      %s35 = scalar_lea.hbm %s3, %s34
      %s36 = sshll.u32 %s35, 4
      %s37 = int_to_ptr.hbm [resolvable:$true] %s36
      %s38 = sshll.u32 [#allocation6], 4
      %s39 = int_to_ptr.vmem [resolvable:$true] %s38
      %44 = dma.hbm_to_vmem [thread:$0]  %s37, 2048, %s39, [#allocation7], 128, 128, 8
    $region9: #{_forward_padded.3} parent=1 // pred_fallthru
      _
    // Predicated region
    $region10: #{_forward_padded.3} parent=1 // pred_check
      _
    $region11: #{_forward_padded.3} parent=1 // pred_check_branch
      %46 = sbr.rel (0) target = $region13
    $region12: #{_forward_padded.3} parent=1 // pred_region
      _
    $region13: #{_forward_padded.3} parent=1 // pred_fallthru
      _
    // Predicated region
    $region14: #{_forward_padded.3} parent=1 // pred_check
      _
    $region15: #{_forward_padded.3} parent=1 // pred_check_branch
      %48 = sbr.rel (0) target = $region17
    $region16: #{_forward_padded.3} parent=1 // pred_region
      _
    $region17: #{_forward_padded.3} parent=1 // pred_fallthru
      _
    // Predicated region
    $region18: #{_forward_padded.3} parent=1 // pred_check
      _
    $region19: #{_forward_padded.3} parent=1 // pred_check_branch
      %50 = sbr.rel (0) target = $region21
    $region20: #{_forward_padded.3} parent=1 // pred_region
      _
    $region21: #{_forward_padded.3} parent=1 // pred_fallthru
      _
    // Predicated region
    $region22: #{_forward_padded.3} parent=1 // pred_check
      _
    $region23: #{_forward_padded.3} parent=1 // pred_check_branch
      %52 = sbr.rel (0) target = $region25
    $region24: #{_forward_padded.3} parent=1 // pred_region
      %54 = dma.done [#allocation7], 2048
    $region25: #{_forward_padded.3} parent=1 // pred_fallthru
      _
    %s55 = sadd.s32 0, 0
    %s56 = sld [smem:[#allocation4 + %s55]]
    %p57 = scmp.lt.s32.totalorder %s56, 0
    %s58 = scalar_select %p57, %s56, 0
    %s59 = smul.addr %s58, 8
    %s60 = scalar_lea.vmem %s2, %s59
    %s61 = sadd.s32 0, 0
    %s62 = sld [smem:[#allocation4 + %s61]]
    %p63 = scmp.lt.s32.totalorder %s62, 0
    %s64 = scalar_select %p63, %s62, 0
    %s65 = smul.addr %s64, 8
    %s66 = scalar_lea.vmem %s2, %s65
    %s67 = sadd.s32 0, 0
    %s68 = sld [smem:[#allocation4 + %s67]]
    %s69 = sadd.s32 0, 0
    %s70 = sld [smem:[#allocation4 + %s69]]
    %s71 = smul.u32 16, %s70
    %p72 = scmp.eq.s32.totalorder 0, 0
    // Predicated region
    $region26: #{_forward_padded.3} parent=1 // pred_check
      %p73 = pneg %p72
    $region27: #{_forward_padded.3} parent=1 // pred_check_branch
      %75 = sbr.rel (%p73) target = $region29
    $region28: #{_forward_padded.3} parent=1 // pred_region
      %76 = vst [vmem:[#allocation2] sm:$0xff] 0.0
      %77 = vst [vmem:[#allocation2 + $0x8] sm:$0xff] 0.0
      %78 = vst [vmem:[#allocation2 + $0x10] sm:$0xff] 0.0
      %79 = vst [vmem:[#allocation2 + $0x18] sm:$0xff] 0.0
      %80 = vst [vmem:[#allocation2 + $0x20] sm:$0xff] 0.0
      %81 = vst [vmem:[#allocation2 + $0x28] sm:$0xff] 0.0
      %82 = vst [vmem:[#allocation2 + $0x30] sm:$0xff] 0.0
      %83 = vst [vmem:[#allocation2 + $0x38] sm:$0xff] 0.0
      %84 = vst [vmem:[#allocation2 + $0x40] sm:$0xff] 0.0
      %85 = vst [vmem:[#allocation2 + $0x48] sm:$0xff] 0.0
      %86 = vst [vmem:[#allocation2 + $0x50] sm:$0xff] 0.0
      %87 = vst [vmem:[#allocation2 + $0x58] sm:$0xff] 0.0
      %88 = vst [vmem:[#allocation2 + $0x60] sm:$0xff] 0.0
      %89 = vst [vmem:[#allocation2 + $0x68] sm:$0xff] 0.0
      %90 = vst [vmem:[#allocation2 + $0x70] sm:$0xff] 0.0
      %91 = vst [vmem:[#allocation2 + $0x78] sm:$0xff] 0.0
    $region29: #{_forward_padded.3} parent=1 // pred_fallthru
      _
    %s92 = sld [smem:[#allocation5]]
    %p93 = scmp.lt.s32.totalorder 0, %s92
    // Predicated region
    $region30: #{_forward_padded.3} parent=1 // pred_check
      %p94 = pneg %p93
    $region31: #{_forward_padded.3} parent=1 // pred_check_branch
      %96 = sbr.rel (%p94) target = $region33
    $region32: #{_forward_padded.3} parent=1 // pred_region
      %v97 = vld [vmem:[#allocation6] sm:$0xff]
      %v98 = vld [vmem:[#allocation6 + $0x8] sm:$0xff]
      %v99 = vld [vmem:[#allocation6 + $0x10] sm:$0xff]
      %v100 = vld [vmem:[#allocation6 + $0x18] sm:$0xff]
      %v101 = vld [vmem:[#allocation6 + $0x20] sm:$0xff]
      %v102 = vld [vmem:[#allocation6 + $0x28] sm:$0xff]
      %v103 = vld [vmem:[#allocation6 + $0x30] sm:$0xff]
      %v104 = vld [vmem:[#allocation6 + $0x38] sm:$0xff]
      %v105 = vld [vmem:[#allocation6 + $0x40] sm:$0xff]
      %v106 = vld [vmem:[#allocation6 + $0x48] sm:$0xff]
      %v107 = vld [vmem:[#allocation6 + $0x50] sm:$0xff]
      %v108 = vld [vmem:[#allocation6 + $0x58] sm:$0xff]
      %v109 = vld [vmem:[#allocation6 + $0x60] sm:$0xff]
      %v110 = vld [vmem:[#allocation6 + $0x68] sm:$0xff]
      %v111 = vld [vmem:[#allocation6 + $0x70] sm:$0xff]
      %v112 = vld [vmem:[#allocation6 + $0x78] sm:$0xff]
      %v113 = vld [vmem:[%s4] sm:$0xff]
      %v114 = vld [vmem:[%s4 + $0x8] sm:$0xff]
      %v115 = vld [vmem:[%s4 + $0x10] sm:$0xff]
      %v116 = vld [vmem:[%s4 + $0x18] sm:$0xff]
      %v117 = vld [vmem:[%s4 + $0x20] sm:$0xff]
      %v118 = vld [vmem:[%s4 + $0x28] sm:$0xff]
      %v119 = vld [vmem:[%s4 + $0x30] sm:$0xff]
      %v120 = vld [vmem:[%s4 + $0x38] sm:$0xff]
      %v121 = vld [vmem:[%s4 + $0x40] sm:$0xff]
      %v122 = vld [vmem:[%s4 + $0x48] sm:$0xff]
      %v123 = vld [vmem:[%s4 + $0x50] sm:$0xff]
      %v124 = vld [vmem:[%s4 + $0x58] sm:$0xff]
      %v125 = vld [vmem:[%s4 + $0x60] sm:$0xff]
      %v126 = vld [vmem:[%s4 + $0x68] sm:$0xff]
      %v127 = vld [vmem:[%s4 + $0x70] sm:$0xff]
      %v128 = vld [vmem:[%s4 + $0x78] sm:$0xff]
      %129 = vmatpush.msra.mxu0 %v128
      %130 = vmatpush.msra.mxu0 %v127
      %131 = vmatpush.msra.mxu0 %v126
      %132 = vmatpush.msra.mxu0 %v125
      %133 = vmatpush.msra.mxu0 %v124
      %134 = vmatpush.msra.mxu0 %v123
      %135 = vmatpush.msra.mxu0 %v122
      %136 = vmatpush.msra.mxu0 %v121
      %137 = vmatpush.msra.mxu0 %v120
      %138 = vmatpush.msra.mxu0 %v119
      %139 = vmatpush.msra.mxu0 %v118
      %140 = vmatpush.msra.mxu0 %v117
      %141 = vmatpush.msra.mxu0 %v116
      %142 = vmatpush.msra.mxu0 %v115
      %143 = vmatpush.msra.mxu0 %v114
      %144 = vmatpush.msra.mxu0 %v113
      %145 = vmatmul.f32.gmra.mxu0 %v97
      %v146 = vpop.f32.mrf.mxu0
      %v147 = vadd.f32 0.0, %v146
      %148 = vmatmul.f32.gmra.mxu0 %v98
      %v149 = vpop.f32.mrf.mxu0
      %v150 = vadd.f32 0.0, %v149
      %151 = vmatmul.f32.gmra.mxu0 %v99
      %v152 = vpop.f32.mrf.mxu0
      %v153 = vadd.f32 0.0, %v152
      %154 = vmatmul.f32.gmra.mxu0 %v100
      %v155 = vpop.f32.mrf.mxu0
      %v156 = vadd.f32 0.0, %v155
      %157 = vmatmul.f32.gmra.mxu0 %v101
      %v158 = vpop.f32.mrf.mxu0
      %v159 = vadd.f32 0.0, %v158
      %160 = vmatmul.f32.gmra.mxu0 %v102
      %v161 = vpop.f32.mrf.mxu0
      %v162 = vadd.f32 0.0, %v161
      %163 = vmatmul.f32.gmra.mxu0 %v103
      %v164 = vpop.f32.mrf.mxu0
      %v165 = vadd.f32 0.0, %v164
      %166 = vmatmul.f32.gmra.mxu0 %v104
      %v167 = vpop.f32.mrf.mxu0
      %v168 = vadd.f32 0.0, %v167
      %169 = vmatmul.f32.gmra.mxu0 %v105
      %v170 = vpop.f32.mrf.mxu0
      %v171 = vadd.f32 0.0, %v170
      %172 = vmatmul.f32.gmra.mxu0 %v106
      %v173 = vpop.f32.mrf.mxu0
      %v174 = vadd.f32 0.0, %v173
      %175 = vmatmul.f32.gmra.mxu0 %v107
      %v176 = vpop.f32.mrf.mxu0
      %v177 = vadd.f32 0.0, %v176
      %178 = vmatmul.f32.gmra.mxu0 %v108
      %v179 = vpop.f32.mrf.mxu0
      %v180 = vadd.f32 0.0, %v179
      %181 = vmatmul.f32.gmra.mxu0 %v109
      %v182 = vpop.f32.mrf.mxu0
      %v183 = vadd.f32 0.0, %v182
      %184 = vmatmul.f32.gmra.mxu0 %v110
      %v185 = vpop.f32.mrf.mxu0
      %v186 = vadd.f32 0.0, %v185
      %187 = vmatmul.f32.gmra.mxu0 %v111
      %v188 = vpop.f32.mrf.mxu0
      %v189 = vadd.f32 0.0, %v188
      %190 = vmatmul.f32.gmra.mxu0 %v112
      %v191 = vpop.f32.mrf.mxu0
      %v192 = vadd.f32 0.0, %v191
      %193 = vdwg.mxu0
      %v194 = vld [vmem:[#allocation2] sm:$0xff]
      %v195 = vld [vmem:[#allocation2 + $0x8] sm:$0xff]
      %v196 = vld [vmem:[#allocation2 + $0x10] sm:$0xff]
      %v197 = vld [vmem:[#allocation2 + $0x18] sm:$0xff]
      %v198 = vld [vmem:[#allocation2 + $0x20] sm:$0xff]
      %v199 = vld [vmem:[#allocation2 + $0x28] sm:$0xff]
      %v200 = vld [vmem:[#allocation2 + $0x30] sm:$0xff]
      %v201 = vld [vmem:[#allocation2 + $0x38] sm:$0xff]
      %v202 = vld [vmem:[#allocation2 + $0x40] sm:$0xff]
      %v203 = vld [vmem:[#allocation2 + $0x48] sm:$0xff]
      %v204 = vld [vmem:[#allocation2 + $0x50] sm:$0xff]
      %v205 = vld [vmem:[#allocation2 + $0x58] sm:$0xff]
      %v206 = vld [vmem:[#allocation2 + $0x60] sm:$0xff]
      %v207 = vld [vmem:[#allocation2 + $0x68] sm:$0xff]
      %v208 = vld [vmem:[#allocation2 + $0x70] sm:$0xff]
      %v209 = vld [vmem:[#allocation2 + $0x78] sm:$0xff]
      %v210 = vld [vmem:[%s66] sm:$0xff]
      %v211 = vld [vmem:[%s66 + $0x8] sm:$0xff]
      %v212 = vld [vmem:[%s66 + $0x10] sm:$0xff]
      %v213 = vld [vmem:[%s66 + $0x18] sm:$0xff]
      %v214 = vld [vmem:[%s66 + $0x20] sm:$0xff]
      %v215 = vld [vmem:[%s66 + $0x28] sm:$0xff]
      %v216 = vld [vmem:[%s66 + $0x30] sm:$0xff]
      %v217 = vld [vmem:[%s66 + $0x38] sm:$0xff]
      %v218 = vld [vmem:[%s66 + $0x40] sm:$0xff]
      %v219 = vld [vmem:[%s66 + $0x48] sm:$0xff]
      %v220 = vld [vmem:[%s66 + $0x50] sm:$0xff]
      %v221 = vld [vmem:[%s66 + $0x58] sm:$0xff]
      %v222 = vld [vmem:[%s66 + $0x60] sm:$0xff]
      %v223 = vld [vmem:[%s66 + $0x68] sm:$0xff]
      %v224 = vld [vmem:[%s66 + $0x70] sm:$0xff]
      %v225 = vld [vmem:[%s66 + $0x78] sm:$0xff]
      %226 = vmatpush.msra.mxu0 %v192
      %227 = vmatpush.msra.mxu0 %v189
      %228 = vmatpush.msra.mxu0 %v186
      %229 = vmatpush.msra.mxu0 %v183
      %230 = vmatpush.msra.mxu0 %v180
      %231 = vmatpush.msra.mxu0 %v177
      %232 = vmatpush.msra.mxu0 %v174
      %233 = vmatpush.msra.mxu0 %v171
      %234 = vmatpush.msra.mxu0 %v168
      %235 = vmatpush.msra.mxu0 %v165
      %236 = vmatpush.msra.mxu0 %v162
      %237 = vmatpush.msra.mxu0 %v159
      %238 = vmatpush.msra.mxu0 %v156
      %239 = vmatpush.msra.mxu0 %v153
      %240 = vmatpush.msra.mxu0 %v150
      %241 = vmatpush.msra.mxu0 %v147
      %242 = vmatmul.f32.gmra.mxu0 %v210
      %v243 = vpop.f32.mrf.mxu0
      %v244 = vadd.f32 0.0, %v243
      %245 = vmatmul.f32.gmra.mxu0 %v211
      %v246 = vpop.f32.mrf.mxu0
      %v247 = vadd.f32 0.0, %v246
      %248 = vmatmul.f32.gmra.mxu0 %v212
      %v249 = vpop.f32.mrf.mxu0
      %v250 = vadd.f32 0.0, %v249
      %251 = vmatmul.f32.gmra.mxu0 %v213
      %v252 = vpop.f32.mrf.mxu0
      %v253 = vadd.f32 0.0, %v252
      %254 = vmatmul.f32.gmra.mxu0 %v214
      %v255 = vpop.f32.mrf.mxu0
      %v256 = vadd.f32 0.0, %v255
      %257 = vmatmul.f32.gmra.mxu0 %v215
      %v258 = vpop.f32.mrf.mxu0
      %v259 = vadd.f32 0.0, %v258
      %260 = vmatmul.f32.gmra.mxu0 %v216
      %v261 = vpop.f32.mrf.mxu0
      %v262 = vadd.f32 0.0, %v261
      %263 = vmatmul.f32.gmra.mxu0 %v217
      %v264 = vpop.f32.mrf.mxu0
      %v265 = vadd.f32 0.0, %v264
      %266 = vmatmul.f32.gmra.mxu0 %v218
      %v267 = vpop.f32.mrf.mxu0
      %v268 = vadd.f32 0.0, %v267
      %269 = vmatmul.f32.gmra.mxu0 %v219
      %v270 = vpop.f32.mrf.mxu0
      %v271 = vadd.f32 0.0, %v270
      %272 = vmatmul.f32.gmra.mxu0 %v220
      %v273 = vpop.f32.mrf.mxu0
      %v274 = vadd.f32 0.0, %v273
      %275 = vmatmul.f32.gmra.mxu0 %v221
      %v276 = vpop.f32.mrf.mxu0
      %v277 = vadd.f32 0.0, %v276
      %278 = vmatmul.f32.gmra.mxu0 %v222
      %v279 = vpop.f32.mrf.mxu0
      %v280 = vadd.f32 0.0, %v279
      %281 = vmatmul.f32.gmra.mxu0 %v223
      %v282 = vpop.f32.mrf.mxu0
      %v283 = vadd.f32 0.0, %v282
      %284 = vmatmul.f32.gmra.mxu0 %v224
      %v285 = vpop.f32.mrf.mxu0
      %v286 = vadd.f32 0.0, %v285
      %287 = vmatmul.f32.gmra.mxu0 %v225
      %v288 = vpop.f32.mrf.mxu0
      %v289 = vadd.f32 0.0, %v288
      %290 = vdwg.mxu0
      %v291 = vadd.f32 %v194, %v244
      %v292 = vadd.f32 %v195, %v247
      %v293 = vadd.f32 %v196, %v250
      %v294 = vadd.f32 %v197, %v253
      %v295 = vadd.f32 %v198, %v256
      %v296 = vadd.f32 %v199, %v259
      %v297 = vadd.f32 %v200, %v262
      %v298 = vadd.f32 %v201, %v265
      %v299 = vadd.f32 %v202, %v268
      %v300 = vadd.f32 %v203, %v271
      %v301 = vadd.f32 %v204, %v274
      %v302 = vadd.f32 %v205, %v277
      %v303 = vadd.f32 %v206, %v280
      %v304 = vadd.f32 %v207, %v283
      %v305 = vadd.f32 %v208, %v286
      %v306 = vadd.f32 %v209, %v289
      %307 = vst [vmem:[#allocation2] sm:$0xff] %v291
      %308 = vst [vmem:[#allocation2 + $0x8] sm:$0xff] %v292
      %309 = vst [vmem:[#allocation2 + $0x10] sm:$0xff] %v293
      %310 = vst [vmem:[#allocation2 + $0x18] sm:$0xff] %v294
      %311 = vst [vmem:[#allocation2 + $0x20] sm:$0xff] %v295
      %312 = vst [vmem:[#allocation2 + $0x28] sm:$0xff] %v296
      %313 = vst [vmem:[#allocation2 + $0x30] sm:$0xff] %v297
      %314 = vst [vmem:[#allocation2 + $0x38] sm:$0xff] %v298
      %315 = vst [vmem:[#allocation2 + $0x40] sm:$0xff] %v299
      %316 = vst [vmem:[#allocation2 + $0x48] sm:$0xff] %v300
      %317 = vst [vmem:[#allocation2 + $0x50] sm:$0xff] %v301
      %318 = vst [vmem:[#allocation2 + $0x58] sm:$0xff] %v302
      %319 = vst [vmem:[#allocation2 + $0x60] sm:$0xff] %v303
      %320 = vst [vmem:[#allocation2 + $0x68] sm:$0xff] %v304
      %321 = vst [vmem:[#allocation2 + $0x70] sm:$0xff] %v305
      %322 = vst [vmem:[#allocation2 + $0x78] sm:$0xff] %v306
    $region33: #{_forward_padded.3} parent=1 // pred_fallthru
      _
    // Predicated region
    $region34: #{_forward_padded.3} parent=1 // pred_check
      %p323 = pneg %p72
    $region35: #{_forward_padded.3} parent=1 // pred_check_branch
      %325 = sbr.rel (%p323) target = $region37
    $region36: #{_forward_padded.3} parent=1 // pred_region
      %v326 = vld [vmem:[#allocation2] sm:$0xff]
      %v327 = vld [vmem:[#allocation2 + $0x8] sm:$0xff]
      %v328 = vld [vmem:[#allocation2 + $0x10] sm:$0xff]
      %v329 = vld [vmem:[#allocation2 + $0x18] sm:$0xff]
      %v330 = vld [vmem:[#allocation2 + $0x20] sm:$0xff]
      %v331 = vld [vmem:[#allocation2 + $0x28] sm:$0xff]
      %v332 = vld [vmem:[#allocation2 + $0x30] sm:$0xff]
      %v333 = vld [vmem:[#allocation2 + $0x38] sm:$0xff]
      %v334 = vld [vmem:[#allocation2 + $0x40] sm:$0xff]
      %v335 = vld [vmem:[#allocation2 + $0x48] sm:$0xff]
      %v336 = vld [vmem:[#allocation2 + $0x50] sm:$0xff]
      %v337 = vld [vmem:[#allocation2 + $0x58] sm:$0xff]
      %v338 = vld [vmem:[#allocation2 + $0x60] sm:$0xff]
      %v339 = vld [vmem:[#allocation2 + $0x68] sm:$0xff]
      %v340 = vld [vmem:[#allocation2 + $0x70] sm:$0xff]
      %v341 = vld [vmem:[#allocation2 + $0x78] sm:$0xff]
      %v342 = vld [vmem:[%s5] sm:$0x1]
      %v344 = vperm.slane %v342, 0
      %v346 = vadd.f32 %v326, %v344
      %v347 = vadd.f32 %v327, %v344
      %v348 = vadd.f32 %v328, %v344
      %v349 = vadd.f32 %v329, %v344
      %v350 = vadd.f32 %v330, %v344
      %v351 = vadd.f32 %v331, %v344
      %v352 = vadd.f32 %v332, %v344
      %v353 = vadd.f32 %v333, %v344
      %v354 = vadd.f32 %v334, %v344
      %v355 = vadd.f32 %v335, %v344
      %v356 = vadd.f32 %v336, %v344
      %v357 = vadd.f32 %v337, %v344
      %v358 = vadd.f32 %v338, %v344
      %v359 = vadd.f32 %v339, %v344
      %v360 = vadd.f32 %v340, %v344
      %v361 = vadd.f32 %v341, %v344
      %v362 = vmax.f32 %v346, 0.0
      %v363 = vmax.f32 %v347, 0.0
      %v364 = vmax.f32 %v348, 0.0
      %v365 = vmax.f32 %v349, 0.0
      %v366 = vmax.f32 %v350, 0.0
      %v367 = vmax.f32 %v351, 0.0
      %v368 = vmax.f32 %v352, 0.0
      %v369 = vmax.f32 %v353, 0.0
      %v370 = vmax.f32 %v354, 0.0
      %v371 = vmax.f32 %v355, 0.0
      %v372 = vmax.f32 %v356, 0.0
      %v373 = vmax.f32 %v357, 0.0
      %v374 = vmax.f32 %v358, 0.0
      %v375 = vmax.f32 %v359, 0.0
      %v376 = vmax.f32 %v360, 0.0
      %v377 = vmax.f32 %v361, 0.0
      %378 = vst [vmem:[%s7] sm:$0xff] %v362
      %379 = vst [vmem:[%s7 + $0x8] sm:$0xff] %v363
      %380 = vst [vmem:[%s7 + $0x10] sm:$0xff] %v364
      %381 = vst [vmem:[%s7 + $0x18] sm:$0xff] %v365
      %382 = vst [vmem:[%s7 + $0x20] sm:$0xff] %v366
      %383 = vst [vmem:[%s7 + $0x28] sm:$0xff] %v367
      %384 = vst [vmem:[%s7 + $0x30] sm:$0xff] %v368
      %385 = vst [vmem:[%s7 + $0x38] sm:$0xff] %v369
      %386 = vst [vmem:[%s7 + $0x40] sm:$0xff] %v370
      %387 = vst [vmem:[%s7 + $0x48] sm:$0xff] %v371
      %388 = vst [vmem:[%s7 + $0x50] sm:$0xff] %v372
      %389 = vst [vmem:[%s7 + $0x58] sm:$0xff] %v373
      %390 = vst [vmem:[%s7 + $0x60] sm:$0xff] %v374
      %391 = vst [vmem:[%s7 + $0x68] sm:$0xff] %v375
      %392 = vst [vmem:[%s7 + $0x70] sm:$0xff] %v376
      %393 = vst [vmem:[%s7 + $0x78] sm:$0xff] %v377
      %v394 = vld [vmem:[%s6] sm:$0xff]
      %395 = vmatpush.msra.mxu0 %v377
      %396 = vmatpush.msra.mxu0 %v376
      %397 = vmatpush.msra.mxu0 %v375
      %398 = vmatpush.msra.mxu0 %v374
      %399 = vmatpush.msra.mxu0 %v373
      %400 = vmatpush.msra.mxu0 %v372
      %401 = vmatpush.msra.mxu0 %v371
      %402 = vmatpush.msra.mxu0 %v370
      %403 = vmatpush.msra.mxu0 %v369
      %404 = vmatpush.msra.mxu0 %v368
      %405 = vmatpush.msra.mxu0 %v367
      %406 = vmatpush.msra.mxu0 %v366
      %407 = vmatpush.msra.mxu0 %v365
      %408 = vmatpush.msra.mxu0 %v364
      %409 = vmatpush.msra.mxu0 %v363
      %410 = vmatpush.msra.mxu0 %v362
      %411 = vmatmul.f32.gmra.mxu0 %v394
      %v412 = vpop.f32.mrf.mxu0
      %v413 = vadd.f32 0.0, %v412
      %414 = vdwg.mxu0
      %415 = vst [vmem:[%s8] sm:$0xff] %v413
    $region37: #{_forward_padded.3} parent=1 // pred_fallthru
      _
    // Predicated region
    $region38: #{_forward_padded.3} parent=1 // pred_check
      _
    $region39: #{_forward_padded.3} parent=1 // pred_check_branch
      %417 = sbr.rel (0) target = $region41
    $region40: #{_forward_padded.3} parent=1 // pred_region
      _
    $region41: #{_forward_padded.3} parent=1 // pred_fallthru
      _
    // Predicated region
    $region42: #{_forward_padded.3} parent=1 // pred_check
      _
    $region43: #{_forward_padded.3} parent=1 // pred_check_branch
      %419 = sbr.rel (0) target = $region45
    $region44: #{_forward_padded.3} parent=1 // pred_region
      _
    $region45: #{_forward_padded.3} parent=1 // pred_fallthru
      _
    // Predicated region
    $region46: #{_forward_padded.3} parent=1 // pred_check
      _
    $region47: #{_forward_padded.3} parent=1 // pred_check_branch
      %421 = sbr.rel (0) target = $region49
    $region48: #{_forward_padded.3} parent=1 // pred_region
      _
    $region49: #{_forward_padded.3} parent=1 // pred_fallthru
      _
    // Predicated region
    $region50: #{_forward_padded.3} parent=1 // pred_check
      _
    $region51: #{_forward_padded.3} parent=1 // pred_check_branch
      %423 = sbr.rel (0) target = $region53
    $region52: #{_forward_padded.3} parent=1 // pred_region
      _
    $region53: #{_forward_padded.3} parent=1 // pred_fallthru
      _
    %424 = vsyncpa [#allocation7], 1

// kernel: _forward_padded.4
$region0: #{_forward_padded.4}
  #allocation0 [shape = 'u32[]', space=smem, size = 0x4, offset = 0x4, fixed_abs, tag = 'smem constant byte address 0x4 - core index']
  #allocation1 [shape = 'u32[72,128]{1,0:T(1,128)}', space=vmem, size = 0x9000, scoped, tag = 'internal scratch']
  #allocation2 [shape = 'f32[128,128]{1,0:T(8,128)}', space=vmem, size = 0x10000, scoped, tag = 'scratch operand']
  #allocation3 [shape = 's32[1]{0}', space=sflag, size = 0x4, scoped, tag = 'scoped memory for _forward_padded.4']
  #allocation4 [shape = 's32[1]{0:T(128)S(6)}', space=smem, size = 0x200, scoped, tag = 'prefetched SMEM operand 0']
  #allocation5 [shape = 's32[1]{0:T(128)S(6)}', space=smem, size = 0x200, scoped, tag = 'prefetched SMEM operand 1']
  %s0 = inlined_call_operand.<no memory space> [shape: s32[1], index: 0, kind: input, shape index: {}]
  %s1 = inlined_call_operand.<no memory space> [shape: s32[1], index: 1, kind: input, shape index: {}]
  %s2 = inlined_call_operand.vmem [shape: f32[128,128], index: 2, kind: input, shape index: {}]
  %s3 = inlined_call_operand.vmem [shape: f32[128,128], index: 3, kind: input, shape index: {}]
  %s4 = inlined_call_operand.vmem [shape: f32[128,128], index: 4, kind: input, shape index: {}]
  %s5 = inlined_call_operand.vmem [shape: f32[1,128], index: 5, kind: input, shape index: {}]
  %s6 = inlined_call_operand.vmem [shape: f32[8,128], index: 6, kind: input, shape index: {}]
  %s7 = inlined_call_operand.vmem [shape: f32[128,128], index: 7, kind: output, shape index: {0}]
  %s8 = inlined_call_operand.vmem [shape: f32[8,128], index: 8, kind: output, shape index: {1}]
  %9 = xla_tuple %s7, %s8
  %s10 = sld [smem:[#allocation0]]
  $region50: #{_forward_padded.4} parent=0
    _
  %s12 = ssub.s32 1, %s10
  %s13 = scalar_select 0, %s12, %s10
  %14 = sst [smem:[#allocation4]] %s0
  %15 = sst [smem:[#allocation5]] %s1
  // Predicated region
  $region2: #{_forward_padded.4} parent=0 // pred_check
    _
  $region3: #{_forward_padded.4} parent=0 // pred_check_branch
    %17 = sbr.rel (0) target = $region5
  $region4: #{_forward_padded.4} parent=0 // pred_region
    %s18 = sadd.s32 0, 0
    %s19 = sld [smem:[#allocation4 + %s18]]
    %p20 = scmp.lt.s32.totalorder %s19, 0
    %s21 = scalar_select %p20, %s19, 0
    %s22 = smul.addr %s21, 8
    %s23 = scalar_lea.vmem %s2, %s22
    %s24 = sadd.s32 0, 0
    %s25 = sld [smem:[#allocation4 + %s24]]
  $region5: #{_forward_padded.4} parent=0 // pred_fallthru
    _
  // Predicated region
  $region6: #{_forward_padded.4} parent=0 // pred_check
    _
  $region7: #{_forward_padded.4} parent=0 // pred_check_branch
    %27 = sbr.rel (0) target = $region9
  $region8: #{_forward_padded.4} parent=0 // pred_region
    %s28 = sadd.s32 0, 0
    %s29 = sld [smem:[#allocation4 + %s28]]
    %s30 = smul.u32 16, %s29
    %p31 = scmp.lt.s32.totalorder %s30, 15
    %s32 = scalar_select %p31, %s30, 15
    %s33 = smul.addr %s32, 8
    %s34 = scalar_lea.vmem %s3, %s33
    %s35 = sadd.s32 0, 0
    %s36 = sld [smem:[#allocation4 + %s35]]
    %s37 = smul.u32 16, %s36
  $region9: #{_forward_padded.4} parent=0 // pred_fallthru
    _
  // Predicated region
  $region10: #{_forward_padded.4} parent=0 // pred_check
    _
  $region11: #{_forward_padded.4} parent=0 // pred_check_branch
    %39 = sbr.rel (0) target = $region13
  $region12: #{_forward_padded.4} parent=0 // pred_region
    _
  $region13: #{_forward_padded.4} parent=0 // pred_fallthru
    _
  // Predicated region
  $region14: #{_forward_padded.4} parent=0 // pred_check
    _
  $region15: #{_forward_padded.4} parent=0 // pred_check_branch
    %41 = sbr.rel (0) target = $region17
  $region16: #{_forward_padded.4} parent=0 // pred_region
    _
  $region17: #{_forward_padded.4} parent=0 // pred_fallthru
    _
  // Predicated region
  $region18: #{_forward_padded.4} parent=0 // pred_check
    _
  $region19: #{_forward_padded.4} parent=0 // pred_check_branch
    %43 = sbr.rel (0) target = $region21
  $region20: #{_forward_padded.4} parent=0 // pred_region
    _
  $region21: #{_forward_padded.4} parent=0 // pred_fallthru
    _
  %s44 = sadd.s32 0, 0
  %s45 = sld [smem:[#allocation4 + %s44]]
  %p46 = scmp.lt.s32.totalorder %s45, 0
  %s47 = scalar_select %p46, %s45, 0
  %s48 = smul.addr %s47, 8
  %s49 = scalar_lea.vmem %s2, %s48
  %s50 = sadd.s32 0, 0
  %s51 = sld [smem:[#allocation4 + %s50]]
  %s52 = smul.u32 16, %s51
  %p53 = scmp.lt.s32.totalorder %s52, 15
  %s54 = scalar_select %p53, %s52, 15
  %s55 = smul.addr %s54, 8
  %s56 = scalar_lea.vmem %s3, %s55
  %s57 = sadd.s32 0, 0
  %s58 = sld [smem:[#allocation4 + %s57]]
  %p59 = scmp.lt.s32.totalorder %s58, 0
  %s60 = scalar_select %p59, %s58, 0
  %s61 = smul.addr %s60, 8
  %s62 = scalar_lea.vmem %s2, %s61
  %s63 = sadd.s32 0, 0
  %s64 = sld [smem:[#allocation4 + %s63]]
  %s65 = sadd.s32 0, 0
  %s66 = sld [smem:[#allocation4 + %s65]]
  %s67 = smul.u32 16, %s66
  %p68 = scmp.lt.s32.totalorder %s67, 15
  %s69 = scalar_select %p68, %s67, 15
  %s70 = smul.addr %s69, 8
  %s71 = scalar_lea.vmem %s3, %s70
  %s72 = sadd.s32 0, 0
  %s73 = sld [smem:[#allocation4 + %s72]]
  %s74 = smul.u32 16, %s73
  %p75 = scmp.eq.s32.totalorder 0, 0
  // Predicated region
  $region22: #{_forward_padded.4} parent=0 // pred_check
    %p76 = pneg %p75
  $region23: #{_forward_padded.4} parent=0 // pred_check_branch
    %78 = sbr.rel (%p76) target = $region25
  $region24: #{_forward_padded.4} parent=0 // pred_region
    %79 = vst [vmem:[#allocation2] sm:$0xff] 0.0
    %80 = vst [vmem:[#allocation2 + $0x8] sm:$0xff] 0.0
    %81 = vst [vmem:[#allocation2 + $0x10] sm:$0xff] 0.0
    %82 = vst [vmem:[#allocation2 + $0x18] sm:$0xff] 0.0
    %83 = vst [vmem:[#allocation2 + $0x20] sm:$0xff] 0.0
    %84 = vst [vmem:[#allocation2 + $0x28] sm:$0xff] 0.0
    %85 = vst [vmem:[#allocation2 + $0x30] sm:$0xff] 0.0
    %86 = vst [vmem:[#allocation2 + $0x38] sm:$0xff] 0.0
    %87 = vst [vmem:[#allocation2 + $0x40] sm:$0xff] 0.0
    %88 = vst [vmem:[#allocation2 + $0x48] sm:$0xff] 0.0
    %89 = vst [vmem:[#allocation2 + $0x50] sm:$0xff] 0.0
    %90 = vst [vmem:[#allocation2 + $0x58] sm:$0xff] 0.0
    %91 = vst [vmem:[#allocation2 + $0x60] sm:$0xff] 0.0
    %92 = vst [vmem:[#allocation2 + $0x68] sm:$0xff] 0.0
    %93 = vst [vmem:[#allocation2 + $0x70] sm:$0xff] 0.0
    %94 = vst [vmem:[#allocation2 + $0x78] sm:$0xff] 0.0
  $region25: #{_forward_padded.4} parent=0 // pred_fallthru
    _
  %s95 = sld [smem:[#allocation5]]
  %p96 = scmp.lt.s32.totalorder 0, %s95
  // Predicated region
  $region26: #{_forward_padded.4} parent=0 // pred_check
    %p97 = pneg %p96
  $region27: #{_forward_padded.4} parent=0 // pred_check_branch
    %99 = sbr.rel (%p97) target = $region29
  $region28: #{_forward_padded.4} parent=0 // pred_region
    %v100 = vld [vmem:[%s71] sm:$0xff]
    %v101 = vld [vmem:[%s71 + $0x8] sm:$0xff]
    %v102 = vld [vmem:[%s71 + $0x10] sm:$0xff]
    %v103 = vld [vmem:[%s71 + $0x18] sm:$0xff]
    %v104 = vld [vmem:[%s71 + $0x20] sm:$0xff]
    %v105 = vld [vmem:[%s71 + $0x28] sm:$0xff]
    %v106 = vld [vmem:[%s71 + $0x30] sm:$0xff]
    %v107 = vld [vmem:[%s71 + $0x38] sm:$0xff]
    %v108 = vld [vmem:[%s71 + $0x40] sm:$0xff]
    %v109 = vld [vmem:[%s71 + $0x48] sm:$0xff]
    %v110 = vld [vmem:[%s71 + $0x50] sm:$0xff]
    %v111 = vld [vmem:[%s71 + $0x58] sm:$0xff]
    %v112 = vld [vmem:[%s71 + $0x60] sm:$0xff]
    %v113 = vld [vmem:[%s71 + $0x68] sm:$0xff]
    %v114 = vld [vmem:[%s71 + $0x70] sm:$0xff]
    %v115 = vld [vmem:[%s71 + $0x78] sm:$0xff]
    %v116 = vld [vmem:[%s4] sm:$0xff]
    %v117 = vld [vmem:[%s4 + $0x8] sm:$0xff]
    %v118 = vld [vmem:[%s4 + $0x10] sm:$0xff]
    %v119 = vld [vmem:[%s4 + $0x18] sm:$0xff]
    %v120 = vld [vmem:[%s4 + $0x20] sm:$0xff]
    %v121 = vld [vmem:[%s4 + $0x28] sm:$0xff]
    %v122 = vld [vmem:[%s4 + $0x30] sm:$0xff]
    %v123 = vld [vmem:[%s4 + $0x38] sm:$0xff]
    %v124 = vld [vmem:[%s4 + $0x40] sm:$0xff]
    %v125 = vld [vmem:[%s4 + $0x48] sm:$0xff]
    %v126 = vld [vmem:[%s4 + $0x50] sm:$0xff]
    %v127 = vld [vmem:[%s4 + $0x58] sm:$0xff]
    %v128 = vld [vmem:[%s4 + $0x60] sm:$0xff]
    %v129 = vld [vmem:[%s4 + $0x68] sm:$0xff]
    %v130 = vld [vmem:[%s4 + $0x70] sm:$0xff]
    %v131 = vld [vmem:[%s4 + $0x78] sm:$0xff]
    %132 = vmatpush.msra.mxu0 %v131
    %133 = vmatpush.msra.mxu0 %v130
    %134 = vmatpush.msra.mxu0 %v129
    %135 = vmatpush.msra.mxu0 %v128
    %136 = vmatpush.msra.mxu0 %v127
    %137 = vmatpush.msra.mxu0 %v126
    %138 = vmatpush.msra.mxu0 %v125
    %139 = vmatpush.msra.mxu0 %v124
    %140 = vmatpush.msra.mxu0 %v123
    %141 = vmatpush.msra.mxu0 %v122
    %142 = vmatpush.msra.mxu0 %v121
    %143 = vmatpush.msra.mxu0 %v120
    %144 = vmatpush.msra.mxu0 %v119
    %145 = vmatpush.msra.mxu0 %v118
    %146 = vmatpush.msra.mxu0 %v117
    %147 = vmatpush.msra.mxu0 %v116
    %148 = vmatmul.f32.gmra.mxu0 %v100
    %v149 = vpop.f32.mrf.mxu0
    %v150 = vadd.f32 0.0, %v149
    %151 = vmatmul.f32.gmra.mxu0 %v101
    %v152 = vpop.f32.mrf.mxu0
    %v153 = vadd.f32 0.0, %v152
    %154 = vmatmul.f32.gmra.mxu0 %v102
    %v155 = vpop.f32.mrf.mxu0
    %v156 = vadd.f32 0.0, %v155
    %157 = vmatmul.f32.gmra.mxu0 %v103
    %v158 = vpop.f32.mrf.mxu0
    %v159 = vadd.f32 0.0, %v158
    %160 = vmatmul.f32.gmra.mxu0 %v104
    %v161 = vpop.f32.mrf.mxu0
    %v162 = vadd.f32 0.0, %v161
    %163 = vmatmul.f32.gmra.mxu0 %v105
    %v164 = vpop.f32.mrf.mxu0
    %v165 = vadd.f32 0.0, %v164
    %166 = vmatmul.f32.gmra.mxu0 %v106
    %v167 = vpop.f32.mrf.mxu0
    %v168 = vadd.f32 0.0, %v167
    %169 = vmatmul.f32.gmra.mxu0 %v107
    %v170 = vpop.f32.mrf.mxu0
    %v171 = vadd.f32 0.0, %v170
    %172 = vmatmul.f32.gmra.mxu0 %v108
    %v173 = vpop.f32.mrf.mxu0
    %v174 = vadd.f32 0.0, %v173
    %175 = vmatmul.f32.gmra.mxu0 %v109
    %v176 = vpop.f32.mrf.mxu0
    %v177 = vadd.f32 0.0, %v176
    %178 = vmatmul.f32.gmra.mxu0 %v110
    %v179 = vpop.f32.mrf.mxu0
    %v180 = vadd.f32 0.0, %v179
    %181 = vmatmul.f32.gmra.mxu0 %v111
    %v182 = vpop.f32.mrf.mxu0
    %v183 = vadd.f32 0.0, %v182
    %184 = vmatmul.f32.gmra.mxu0 %v112
    %v185 = vpop.f32.mrf.mxu0
    %v186 = vadd.f32 0.0, %v185
    %187 = vmatmul.f32.gmra.mxu0 %v113
    %v188 = vpop.f32.mrf.mxu0
    %v189 = vadd.f32 0.0, %v188
    %190 = vmatmul.f32.gmra.mxu0 %v114
    %v191 = vpop.f32.mrf.mxu0
    %v192 = vadd.f32 0.0, %v191
    %193 = vmatmul.f32.gmra.mxu0 %v115
    %v194 = vpop.f32.mrf.mxu0
    %v195 = vadd.f32 0.0, %v194
    %196 = vdwg.mxu0
    %v197 = vld [vmem:[#allocation2] sm:$0xff]
    %v198 = vld [vmem:[#allocation2 + $0x8] sm:$0xff]
    %v199 = vld [vmem:[#allocation2 + $0x10] sm:$0xff]
    %v200 = vld [vmem:[#allocation2 + $0x18] sm:$0xff]
    %v201 = vld [vmem:[#allocation2 + $0x20] sm:$0xff]
    %v202 = vld [vmem:[#allocation2 + $0x28] sm:$0xff]
    %v203 = vld [vmem:[#allocation2 + $0x30] sm:$0xff]
    %v204 = vld [vmem:[#allocation2 + $0x38] sm:$0xff]
    %v205 = vld [vmem:[#allocation2 + $0x40] sm:$0xff]
    %v206 = vld [vmem:[#allocation2 + $0x48] sm:$0xff]
    %v207 = vld [vmem:[#allocation2 + $0x50] sm:$0xff]
    %v208 = vld [vmem:[#allocation2 + $0x58] sm:$0xff]
    %v209 = vld [vmem:[#allocation2 + $0x60] sm:$0xff]
    %v210 = vld [vmem:[#allocation2 + $0x68] sm:$0xff]
    %v211 = vld [vmem:[#allocation2 + $0x70] sm:$0xff]
    %v212 = vld [vmem:[#allocation2 + $0x78] sm:$0xff]
    %v213 = vld [vmem:[%s62] sm:$0xff]
    %v214 = vld [vmem:[%s62 + $0x8] sm:$0xff]
    %v215 = vld [vmem:[%s62 + $0x10] sm:$0xff]
    %v216 = vld [vmem:[%s62 + $0x18] sm:$0xff]
    %v217 = vld [vmem:[%s62 + $0x20] sm:$0xff]
    %v218 = vld [vmem:[%s62 + $0x28] sm:$0xff]
    %v219 = vld [vmem:[%s62 + $0x30] sm:$0xff]
    %v220 = vld [vmem:[%s62 + $0x38] sm:$0xff]
    %v221 = vld [vmem:[%s62 + $0x40] sm:$0xff]
    %v222 = vld [vmem:[%s62 + $0x48] sm:$0xff]
    %v223 = vld [vmem:[%s62 + $0x50] sm:$0xff]
    %v224 = vld [vmem:[%s62 + $0x58] sm:$0xff]
    %v225 = vld [vmem:[%s62 + $0x60] sm:$0xff]
    %v226 = vld [vmem:[%s62 + $0x68] sm:$0xff]
    %v227 = vld [vmem:[%s62 + $0x70] sm:$0xff]
    %v228 = vld [vmem:[%s62 + $0x78] sm:$0xff]
    %229 = vmatpush.msra.mxu0 %v195
    %230 = vmatpush.msra.mxu0 %v192
    %231 = vmatpush.msra.mxu0 %v189
    %232 = vmatpush.msra.mxu0 %v186
    %233 = vmatpush.msra.mxu0 %v183
    %234 = vmatpush.msra.mxu0 %v180
    %235 = vmatpush.msra.mxu0 %v177
    %236 = vmatpush.msra.mxu0 %v174
    %237 = vmatpush.msra.mxu0 %v171
    %238 = vmatpush.msra.mxu0 %v168
    %239 = vmatpush.msra.mxu0 %v165
    %240 = vmatpush.msra.mxu0 %v162
    %241 = vmatpush.msra.mxu0 %v159
    %242 = vmatpush.msra.mxu0 %v156
    %243 = vmatpush.msra.mxu0 %v153
    %244 = vmatpush.msra.mxu0 %v150
    %245 = vmatmul.f32.gmra.mxu0 %v213
    %v246 = vpop.f32.mrf.mxu0
    %v247 = vadd.f32 0.0, %v246
    %248 = vmatmul.f32.gmra.mxu0 %v214
    %v249 = vpop.f32.mrf.mxu0
    %v250 = vadd.f32 0.0, %v249
    %251 = vmatmul.f32.gmra.mxu0 %v215
    %v252 = vpop.f32.mrf.mxu0
    %v253 = vadd.f32 0.0, %v252
    %254 = vmatmul.f32.gmra.mxu0 %v216
    %v255 = vpop.f32.mrf.mxu0
    %v256 = vadd.f32 0.0, %v255
    %257 = vmatmul.f32.gmra.mxu0 %v217
    %v258 = vpop.f32.mrf.mxu0
    %v259 = vadd.f32 0.0, %v258
    %260 = vmatmul.f32.gmra.mxu0 %v218
    %v261 = vpop.f32.mrf.mxu0
    %v262 = vadd.f32 0.0, %v261
    %263 = vmatmul.f32.gmra.mxu0 %v219
    %v264 = vpop.f32.mrf.mxu0
    %v265 = vadd.f32 0.0, %v264
    %266 = vmatmul.f32.gmra.mxu0 %v220
    %v267 = vpop.f32.mrf.mxu0
    %v268 = vadd.f32 0.0, %v267
    %269 = vmatmul.f32.gmra.mxu0 %v221
    %v270 = vpop.f32.mrf.mxu0
    %v271 = vadd.f32 0.0, %v270
    %272 = vmatmul.f32.gmra.mxu0 %v222
    %v273 = vpop.f32.mrf.mxu0
    %v274 = vadd.f32 0.0, %v273
    %275 = vmatmul.f32.gmra.mxu0 %v223
    %v276 = vpop.f32.mrf.mxu0
    %v277 = vadd.f32 0.0, %v276
    %278 = vmatmul.f32.gmra.mxu0 %v224
    %v279 = vpop.f32.mrf.mxu0
    %v280 = vadd.f32 0.0, %v279
    %281 = vmatmul.f32.gmra.mxu0 %v225
    %v282 = vpop.f32.mrf.mxu0
    %v283 = vadd.f32 0.0, %v282
    %284 = vmatmul.f32.gmra.mxu0 %v226
    %v285 = vpop.f32.mrf.mxu0
    %v286 = vadd.f32 0.0, %v285
    %287 = vmatmul.f32.gmra.mxu0 %v227
    %v288 = vpop.f32.mrf.mxu0
    %v289 = vadd.f32 0.0, %v288
    %290 = vmatmul.f32.gmra.mxu0 %v228
    %v291 = vpop.f32.mrf.mxu0
    %v292 = vadd.f32 0.0, %v291
    %293 = vdwg.mxu0
    %v294 = vadd.f32 %v197, %v247
    %v295 = vadd.f32 %v198, %v250
    %v296 = vadd.f32 %v199, %v253
    %v297 = vadd.f32 %v200, %v256
    %v298 = vadd.f32 %v201, %v259
    %v299 = vadd.f32 %v202, %v262
    %v300 = vadd.f32 %v203, %v265
    %v301 = vadd.f32 %v204, %v268
    %v302 = vadd.f32 %v205, %v271
    %v303 = vadd.f32 %v206, %v274
    %v304 = vadd.f32 %v207, %v277
    %v305 = vadd.f32 %v208, %v280
    %v306 = vadd.f32 %v209, %v283
    %v307 = vadd.f32 %v210, %v286
    %v308 = vadd.f32 %v211, %v289
    %v309 = vadd.f32 %v212, %v292
    %310 = vst [vmem:[#allocation2] sm:$0xff] %v294
    %311 = vst [vmem:[#allocation2 + $0x8] sm:$0xff] %v295
    %312 = vst [vmem:[#allocation2 + $0x10] sm:$0xff] %v296
    %313 = vst [vmem:[#allocation2 + $0x18] sm:$0xff] %v297
    %314 = vst [vmem:[#allocation2 + $0x20] sm:$0xff] %v298
    %315 = vst [vmem:[#allocation2 + $0x28] sm:$0xff] %v299
    %316 = vst [vmem:[#allocation2 + $0x30] sm:$0xff] %v300
    %317 = vst [vmem:[#allocation2 + $0x38] sm:$0xff] %v301
    %318 = vst [vmem:[#allocation2 + $0x40] sm:$0xff] %v302
    %319 = vst [vmem:[#allocation2 + $0x48] sm:$0xff] %v303
    %320 = vst [vmem:[#allocation2 + $0x50] sm:$0xff] %v304
    %321 = vst [vmem:[#allocation2 + $0x58] sm:$0xff] %v305
    %322 = vst [vmem:[#allocation2 + $0x60] sm:$0xff] %v306
    %323 = vst [vmem:[#allocation2 + $0x68] sm:$0xff] %v307
    %324 = vst [vmem:[#allocation2 + $0x70] sm:$0xff] %v308
    %325 = vst [vmem:[#allocation2 + $0x78] sm:$0xff] %v309
  $region29: #{_forward_padded.4} parent=0 // pred_fallthru
    _
  // Predicated region
  $region30: #{_forward_padded.4} parent=0 // pred_check
    %p326 = pneg %p75
  $region31: #{_forward_padded.4} parent=0 // pred_check_branch
    %328 = sbr.rel (%p326) target = $region33
  $region32: #{_forward_padded.4} parent=0 // pred_region
    %v329 = vld [vmem:[#allocation2] sm:$0xff]
    %v330 = vld [vmem:[#allocation2 + $0x8] sm:$0xff]
    %v331 = vld [vmem:[#allocation2 + $0x10] sm:$0xff]
    %v332 = vld [vmem:[#allocation2 + $0x18] sm:$0xff]
    %v333 = vld [vmem:[#allocation2 + $0x20] sm:$0xff]
    %v334 = vld [vmem:[#allocation2 + $0x28] sm:$0xff]
    %v335 = vld [vmem:[#allocation2 + $0x30] sm:$0xff]
    %v336 = vld [vmem:[#allocation2 + $0x38] sm:$0xff]
    %v337 = vld [vmem:[#allocation2 + $0x40] sm:$0xff]
    %v338 = vld [vmem:[#allocation2 + $0x48] sm:$0xff]
    %v339 = vld [vmem:[#allocation2 + $0x50] sm:$0xff]
    %v340 = vld [vmem:[#allocation2 + $0x58] sm:$0xff]
    %v341 = vld [vmem:[#allocation2 + $0x60] sm:$0xff]
    %v342 = vld [vmem:[#allocation2 + $0x68] sm:$0xff]
    %v343 = vld [vmem:[#allocation2 + $0x70] sm:$0xff]
    %v344 = vld [vmem:[#allocation2 + $0x78] sm:$0xff]
    %v345 = vld [vmem:[%s5] sm:$0x1]
    %v347 = vperm.slane %v345, 0
    %v349 = vadd.f32 %v329, %v347
    %v350 = vadd.f32 %v330, %v347
    %v351 = vadd.f32 %v331, %v347
    %v352 = vadd.f32 %v332, %v347
    %v353 = vadd.f32 %v333, %v347
    %v354 = vadd.f32 %v334, %v347
    %v355 = vadd.f32 %v335, %v347
    %v356 = vadd.f32 %v336, %v347
    %v357 = vadd.f32 %v337, %v347
    %v358 = vadd.f32 %v338, %v347
    %v359 = vadd.f32 %v339, %v347
    %v360 = vadd.f32 %v340, %v347
    %v361 = vadd.f32 %v341, %v347
    %v362 = vadd.f32 %v342, %v347
    %v363 = vadd.f32 %v343, %v347
    %v364 = vadd.f32 %v344, %v347
    %v365 = vmax.f32 %v349, 0.0
    %v366 = vmax.f32 %v350, 0.0
    %v367 = vmax.f32 %v351, 0.0
    %v368 = vmax.f32 %v352, 0.0
    %v369 = vmax.f32 %v353, 0.0
    %v370 = vmax.f32 %v354, 0.0
    %v371 = vmax.f32 %v355, 0.0
    %v372 = vmax.f32 %v356, 0.0
    %v373 = vmax.f32 %v357, 0.0
    %v374 = vmax.f32 %v358, 0.0
    %v375 = vmax.f32 %v359, 0.0
    %v376 = vmax.f32 %v360, 0.0
    %v377 = vmax.f32 %v361, 0.0
    %v378 = vmax.f32 %v362, 0.0
    %v379 = vmax.f32 %v363, 0.0
    %v380 = vmax.f32 %v364, 0.0
    %381 = vst [vmem:[%s7] sm:$0xff] %v365
    %382 = vst [vmem:[%s7 + $0x8] sm:$0xff] %v366
    %383 = vst [vmem:[%s7 + $0x10] sm:$0xff] %v367
    %384 = vst [vmem:[%s7 + $0x18] sm:$0xff] %v368
    %385 = vst [vmem:[%s7 + $0x20] sm:$0xff] %v369
    %386 = vst [vmem:[%s7 + $0x28] sm:$0xff] %v370
    %387 = vst [vmem:[%s7 + $0x30] sm:$0xff] %v371
    %388 = vst [vmem:[%s7 + $0x38] sm:$0xff] %v372
    %389 = vst [vmem:[%s7 + $0x40] sm:$0xff] %v373
    %390 = vst [vmem:[%s7 + $0x48] sm:$0xff] %v374
    %391 = vst [vmem:[%s7 + $0x50] sm:$0xff] %v375
    %392 = vst [vmem:[%s7 + $0x58] sm:$0xff] %v376
    %393 = vst [vmem:[%s7 + $0x60] sm:$0xff] %v377
    %394 = vst [vmem:[%s7 + $0x68] sm:$0xff] %v378
    %395 = vst [vmem:[%s7 + $0x70] sm:$0xff] %v379
    %396 = vst [vmem:[%s7 + $0x78] sm:$0xff] %v380
    %v397 = vld [vmem:[%s6] sm:$0xff]
    %398 = vmatpush.msra.mxu0 %v380
    %399 = vmatpush.msra.mxu0 %v379
    %400 = vmatpush.msra.mxu0 %v378
    %401 = vmatpush.msra.mxu0 %v377
    %402 = vmatpush.msra.mxu0 %v376
    %403 = vmatpush.msra.mxu0 %v375
    %404 = vmatpush.msra.mxu0 %v374
    %405 = vmatpush.msra.mxu0 %v373
    %406 = vmatpush.msra.mxu0 %v372
    %407 = vmatpush.msra.mxu0 %v371
    %408 = vmatpush.msra.mxu0 %v370
    %409 = vmatpush.msra.mxu0 %v369
    %410 = vmatpush.msra.mxu0 %v368
    %411 = vmatpush.msra.mxu0 %v367
    %412 = vmatpush.msra.mxu0 %v366
    %413 = vmatpush.msra.mxu0 %v365
    %414 = vmatmul.f32.gmra.mxu0 %v397
    %v415 = vpop.f32.mrf.mxu0
    %v416 = vadd.f32 0.0, %v415
    %417 = vdwg.mxu0
    %418 = vst [vmem:[%s8] sm:$0xff] %v416
  $region33: #{_forward_padded.4} parent=0 // pred_fallthru
    _
  // Predicated region
  $region34: #{_forward_padded.4} parent=0 // pred_check
    _
  $region35: #{_forward_padded.4} parent=0 // pred_check_branch
    %420 = sbr.rel (0) target = $region37
  $region36: #{_forward_padded.4} parent=0 // pred_region
    _
  $region37: #{_forward_padded.4} parent=0 // pred_fallthru
    _
  // Predicated region
  $region38: #{_forward_padded.4} parent=0 // pred_check
    _
  $region39: #{_forward_padded.4} parent=0 // pred_check_branch
    %422 = sbr.rel (0) target = $region41
  $region40: #{_forward_padded.4} parent=0 // pred_region
    _
  $region41: #{_forward_padded.4} parent=0 // pred_fallthru
    _
  // Predicated region
  $region42: #{_forward_padded.4} parent=0 // pred_check
    _
  $region43: #{_forward_padded.4} parent=0 // pred_check_branch
    %424 = sbr.rel (0) target = $region45
  $region44: #{_forward_padded.4} parent=0 // pred_region
    _
  $region45: #{_forward_padded.4} parent=0 // pred_fallthru
    _
  // Predicated region
  $region46: #{_forward_padded.4} parent=0 // pred_check
    _
  $region47: #{_forward_padded.4} parent=0 // pred_check_branch
    %426 = sbr.rel (0) target = $region49
  $region48: #{_forward_padded.4} parent=0 // pred_region
    _
  $region49: #{_forward_padded.4} parent=0 // pred_fallthru
    _

</llo_original>
